<compile_context>
chip_gen: v6e
topology: v6e:2x2x1
jax: 0.10.0
libtpu: 0.0.40
codegen_flags: <defaults>
</compile_context>

<pallas_src>
import functools
import math

import jax
import jax.numpy as jnp
from jax import lax
from jax.experimental import pallas as pl
from jax.experimental.pallas import tpu as pltpu

GAMMA = -0.1
ZETA = 1.1


def _round_up(x, m):
    return ((x + m - 1) // m) * m


def _vmem_capacity_bytes():
    """Physical VMEM per TensorCore (v5e/v6e: 128 MiB, v7x: 64 MiB)."""
    try:
        info = pltpu.get_tpu_info()
        cap = getattr(info, "vmem_capacity_bytes", None)
        if cap:
            return int(cap)
    except Exception:
        pass
    return 64 * 1024 * 1024  # conservative default (v7x per-TC)


def _choose_tile(dim, align, cap):
    """Largest legal tile <= cap for `dim`.

    If the whole dim fits under `cap`, use it as one full-extent tile (always
    layout-legal, so no padding is needed).  Otherwise prefer a multiple of
    `align` that exactly divides `dim` (no padding); fall back to the aligned
    cap (padding will be required).
    """
    if dim <= cap:
        return dim
    best = (cap // align) * align
    cand = best
    while cand >= align:
        if dim % cand == 0:
            if cand >= max(align, best // 4):   # skip tiny exact divisors
                return cand
            break
        cand -= align
    return best


# --------------------------------------------------------------------------
# Pass 1: elementwise masked-weight precompute  (w_masked = weight * mask)
# --------------------------------------------------------------------------
def _mask_weight_kernel(w_ref, loc_ref, o_ref, *, gamma, zeta):
    # Mask math in f32 (v5e has no bf16 VPU/EUP); sigmoid lands on the EUP slot.
    loc = loc_ref[...].astype(jnp.float32)
    s = jax.nn.sigmoid(loc) * (zeta - gamma) + gamma
    mask = jnp.clip(s, 0.0, 1.0)                              # hard_sigmoid
    o_ref[...] = (w_ref[...].astype(jnp.float32) * mask).astype(o_ref.dtype)


# --------------------------------------------------------------------------
# Pass 2: tiled matmul + bias  (out = x @ w_masked.T + bias)
# --------------------------------------------------------------------------
def _matmul_bias_kernel(x_ref, w_ref, b_ref, o_ref, acc_ref):
    k = pl.program_id(2)

    @pl.when(k == 0)
    def _():
        acc_ref[...] = jnp.zeros_like(acc_ref)

    # Contract the last dim of both operands: (tm, tk) x (tn, tk) -> (tm, tn).
    # No explicit transpose -> no XLU work on the MXU critical path.
    acc_ref[...] += lax.dot_general(
        x_ref[...], w_ref[...],
        dimension_numbers=(((1,), (1,)), ((), ())),
        preferred_element_type=jnp.float32)

    @pl.when(k == pl.num_programs(2) - 1)
    def _():
        out = acc_ref[...] + b_ref[...].astype(jnp.float32)   # bias add in f32
        o_ref[...] = out.astype(o_ref.dtype)


def l0_linear(x, weight, loc, bias=None, gamma=GAMMA, zeta=ZETA,
              tm=None, tn=None, tk=None):
    """Eval-mode L0Linear forward.  Returns (output, penalty)."""
    B, in_f = x.shape
    out_f, in_f_w = weight.shape
    assert in_f_w == in_f and loc.shape == weight.shape

    out_dtype = x.dtype
    # x and the masked weight must enter dot_general in the same dtype.
    dot_dtype = jnp.promote_types(x.dtype, weight.dtype)
    if x.dtype != dot_dtype:
        x = x.astype(dot_dtype)
    if bias is None:
        bias = jnp.zeros((out_f,), dtype=jnp.float32)

    itemsize = jnp.dtype(dot_dtype).itemsize
    out_itemsize = jnp.dtype(out_dtype).itemsize

    # ---- generation-aware VMEM budget & tile selection ---------------------
    vmem_cap = _vmem_capacity_bytes()
    vmem_limit = int(vmem_cap * 0.85)       # ~108 MiB on v5e/v6e, ~54 MiB on v7x
    budget = int(vmem_cap * 0.60)           # budget for double-buffered tiles

    tm_cap, tn_cap, tk_cap = 512, 512, 2048

    def _footprint(tm_, tn_, tk_):
        # x + w double-buffered, out double-buffered, f32 accumulator, bias.
        return (2 * (tm_ * tk_ + tn_ * tk_) * itemsize
                + 2 * tm_ * tn_ * out_itemsize
                + tm_ * tn_ * 4
                + 2 * tn_ * 4)

    while _footprint(tm_cap, tn_cap, tk_cap) > budget and tk_cap > 512:
        tk_cap //= 2
    while _footprint(tm_cap, tn_cap, tk_cap) > budget and tn_cap > 128:
        tn_cap //= 2
        tm_cap = max(tm_cap // 2, 128)

    if tk is None:
        tk = _choose_tile(in_f, 128, tk_cap)
    if tn is None:
        tn = _choose_tile(out_f, 128, tn_cap)
    if tm is None:
        tm = _choose_tile(B, 8, tm_cap)

    # v7x megacore: expose >= 2 "parallel" grid blocks when shapes allow it.
    n_parallel = ((B + tm - 1) // tm) * ((out_f + tn - 1) // tn)
    if n_parallel < 2:
        if tn % 256 == 0:       # halved tile stays a multiple of 128
            tn //= 2
        elif tm % 16 == 0:      # halved tile stays a multiple of 8
            tm //= 2

    K_pad = _round_up(in_f, tk)
    N_pad = _round_up(out_f, tn)
    M_pad = _round_up(B, tm)

    # Pad only when a dim does not already tile exactly.  For dims that fit a
    # single (full-extent) tile or already divide the tile, this is a no-op,
    # so the common aligned case has zero per-call padding copies.
    w_in, loc_in = weight, loc
    if (N_pad, K_pad) != (out_f, in_f):
        w_in = jnp.pad(weight, ((0, N_pad - out_f), (0, K_pad - in_f)))
        loc_in = jnp.pad(loc, ((0, N_pad - out_f), (0, K_pad - in_f)))
    x_in = x
    if (M_pad, K_pad) != (B, in_f):
        x_in = jnp.pad(x, ((0, M_pad - B), (0, K_pad - in_f)))
    b_in = bias.reshape(1, out_f)
    if N_pad != out_f:
        b_in = jnp.pad(b_in, ((0, 0), (0, N_pad - out_f)))

    # ---- pass 1: precompute the masked weight once --------------------------
    mask_grid = (N_pad // tn, K_pad // tk)
    w_masked = pl.pallas_call(
        functools.partial(_mask_weight_kernel, gamma=gamma, zeta=zeta),
        out_shape=jax.ShapeDtypeStruct((N_pad, K_pad), dot_dtype),
        grid_spec=pltpu.PrefetchScalarGridSpec(
            num_scalar_prefetch=0,
            grid=mask_grid,
            in_specs=[
                pl.BlockSpec((tn, tk), lambda j, k: (j, k)),    # weight
                pl.BlockSpec((tn, tk), lambda j, k: (j, k)),    # loc
            ],
            out_specs=pl.BlockSpec((tn, tk), lambda j, k: (j, k)),
        ),
        compiler_params=pltpu.CompilerParams(
            dimension_semantics=("parallel", "parallel"),
            vmem_limit_bytes=vmem_limit,
        ),
        cost_estimate=pl.CostEstimate(
            flops=3 * out_f * in_f,
            transcendentals=out_f * in_f,
            bytes_accessed=(weight.size * weight.dtype.itemsize
                            + loc.size * loc.dtype.itemsize
                            + out_f * in_f * itemsize)),
    )(w_in, loc_in)

    # ---- pass 2: tiled matmul + bias ----------------------------------------
    grid = (M_pad // tm, N_pad // tn, K_pad // tk)
    out_p = pl.pallas_call(
        _matmul_bias_kernel,
        out_shape=jax.ShapeDtypeStruct((M_pad, N_pad), out_dtype),
        grid_spec=pltpu.PrefetchScalarGridSpec(
            num_scalar_prefetch=0,
            grid=grid,
            in_specs=[
                pl.BlockSpec((tm, tk), lambda i, j, k: (i, k)),   # x
                pl.BlockSpec((tn, tk), lambda i, j, k: (j, k)),   # w_masked
                pl.BlockSpec((1, tn), lambda i, j, k: (0, j)),    # bias
            ],
            out_specs=pl.BlockSpec((tm, tn), lambda i, j, k: (i, j)),
            scratch_shapes=[pltpu.VMEM((tm, tn), jnp.float32)],
        ),
        compiler_params=pltpu.CompilerParams(
            dimension_semantics=("parallel", "parallel", "arbitrary"),
            vmem_limit_bytes=vmem_limit,
        ),
        cost_estimate=pl.CostEstimate(
            flops=2 * B * in_f * out_f,
            transcendentals=0,
            bytes_accessed=(x_in.size * itemsize
                            + (M_pad // tm) * N_pad * K_pad * itemsize
                            + B * out_f * out_itemsize)),
    )(x_in, w_masked, b_in)

    out = out_p
    if (M_pad, N_pad) != (B, out_f):
        out = out_p[:B, :out_f]

    penalty = jnp.float32(0.0)   # eval-mode penalty is exactly 0
    return out, penalty


def l0_linear_ref(x, weight, loc, bias, gamma=GAMMA, zeta=ZETA):
    s = jax.nn.sigmoid(loc) * (zeta - gamma) + gamma
    mask = jnp.clip(s, 0.0, 1.0)
    return x @ (weight * mask).T + bias, jnp.float32(0.0)


if __name__ == "__main__":
    # Small shapes consistent with the module: batch=8, in=32, out=16.
    B, IN_F, OUT_F = 8, 32, 16

    key = jax.random.PRNGKey(0)
    k_x, k_w, k_b, k_loc = jax.random.split(key, 4)

    # nn.Linear-style init: U(-1/sqrt(in), 1/sqrt(in)); loc ~ N(0, 0.01).
    bound = 1.0 / math.sqrt(IN_F)
    x = jax.random.normal(k_x, (B, IN_F), dtype=jnp.float32)
    weight = jax.random.uniform(k_w, (OUT_F, IN_F), jnp.float32, -bound, bound)
    bias = jax.random.uniform(k_b, (OUT_F,), jnp.float32, -bound, bound)
    loc = 0.01 * jax.random.normal(k_loc, (OUT_F, IN_F), dtype=jnp.float32)

    out, penalty = l0_linear(x, weight, loc, bias)
    out = jax.block_until_ready(out)

    ref_out, _ = l0_linear_ref(x, weight, loc, bias)
    assert out.shape == (B, OUT_F)
    assert jnp.allclose(out, ref_out, atol=1e-5, rtol=1e-5), float(
        jnp.max(jnp.abs(out - ref_out)))
    assert float(penalty) == 0.0

    print("KERNEL_OK")
</pallas_src>

<mosaic_0001>
module attributes {stable_mosaic.version = 11 : i64} {
  func.func @_mask_weight_kernel(%arg0: i32, %arg1: i32, %arg2: memref<16x32xf32, #tpu.memory_space<vmem>>, %arg3: memref<16x32xf32, #tpu.memory_space<vmem>>, %arg4: memref<16x32xf32, #tpu.memory_space<vmem>>) attributes {dimension_semantics = [#tpu.dimension_semantics<parallel>, #tpu.dimension_semantics<parallel>], iteration_bounds = array<i64: 1, 1>, scalar_prefetch = 0 : i64, scratch_operands = 0 : i64, tpu.core_type = #tpu.core_type<tc>, window_params = [{transform_indices = @transform_0, window_bounds = array<i64: 16, 32>}, {transform_indices = @transform_1, window_bounds = array<i64: 16, 32>}, {transform_indices = @transform_2, window_bounds = array<i64: 16, 32>}]} {
    %c0 = arith.constant 0 : index
    %c0_0 = arith.constant 0 : index
    %0 = vector.load %arg3[%c0, %c0_0] : memref<16x32xf32, #tpu.memory_space<vmem>>, vector<16x32xf32>
    %1 = arith.negf %0 : vector<16x32xf32>
    %2 = math.exp %1 : vector<16x32xf32>
    %cst = arith.constant 1.000000e+00 : f32
    %3 = vector.broadcast %cst : f32 to vector<16x32xf32>
    %4 = arith.addf %3, %2 : vector<16x32xf32>
    %5 = arith.divf %3, %4 : vector<16x32xf32>
    %cst_1 = arith.constant 1.200000e+00 : f32
    %6 = vector.broadcast %cst_1 : f32 to vector<16x32xf32>
    %7 = arith.mulf %5, %6 : vector<16x32xf32>
    %cst_2 = arith.constant -1.000000e-01 : f32
    %8 = vector.broadcast %cst_2 : f32 to vector<16x32xf32>
    %9 = arith.addf %7, %8 : vector<16x32xf32>
    %cst_3 = arith.constant 0.000000e+00 : f32
    %cst_4 = arith.constant 1.000000e+00 : f32
    %10 = vector.broadcast %cst_3 : f32 to vector<16x32xf32>
    %11 = arith.maximumf %10, %9 : vector<16x32xf32>
    %12 = vector.broadcast %cst_4 : f32 to vector<16x32xf32>
    %13 = arith.minimumf %12, %11 : vector<16x32xf32>
    %c0_5 = arith.constant 0 : index
    %c0_6 = arith.constant 0 : index
    %14 = vector.load %arg2[%c0_5, %c0_6] : memref<16x32xf32, #tpu.memory_space<vmem>>, vector<16x32xf32>
    %15 = arith.mulf %14, %13 : vector<16x32xf32>
    %c0_7 = arith.constant 0 : index
    %c0_8 = arith.constant 0 : index
    %16 = vector.load %arg4[%c0_7, %c0_8] : memref<16x32xf32, #tpu.memory_space<vmem>>, vector<16x32xf32>
    tpu.vector_store %arg4[%c0_7, %c0_8], %15 {strides = array<i32>} : memref<16x32xf32, #tpu.memory_space<vmem>>, vector<16x32xf32>,
    return
  }
  func.func @transform_0(%arg0: i32, %arg1: i32) -> (i32, i32) {
    %c0_i32 = arith.constant 0 : i32
    return %arg0, %arg1 : i32, i32
  }
  func.func @transform_1(%arg0: i32, %arg1: i32) -> (i32, i32) {
    %c0_i32 = arith.constant 0 : i32
    return %arg0, %arg1 : i32, i32
  }
  func.func @transform_2(%arg0: i32, %arg1: i32) -> (i32, i32) {
    %c0_i32 = arith.constant 0 : i32
    return %arg0, %arg1 : i32, i32
  }
}

</mosaic_0001>

<llo_original>
// kernel: tpu_custom_call.1
$region0: #{tpu_custom_call.1}
  #allocation0 [shape = 'u32[]', space=smem, size = 0x4, offset = 0x4, fixed_abs, tag = 'smem constant byte address 0x4 - core index']
  #allocation1 [shape = 'u32[144,128]{1,0:T(1,128)}', space=vmem, size = 0x12000, scoped, tag = 'internal scratch']
  %s0 = inlined_call_operand.hbm [shape: f32[16,32], index: 0, kind: input, shape index: {}]
  %s1 = inlined_call_operand.hbm [shape: f32[16,32], index: 1, kind: input, shape index: {}]
  %s2 = inlined_call_operand.hbm [shape: f32[16,32], index: 2, kind: output, shape index: {}]
  %s3 = sld [smem:[#allocation0]]
  $region26: #{tpu_custom_call.1} parent=0
    _
  %s5 = ssub.s32 1, %s3
  %s6 = scalar_select 0, %s5, %s3
  $region1: #{tpu_custom_call.1} parent=0
    #allocation2 [shape = 'u8[8192]{0}', space=vmem, size = 0x2000, scoped, tag = 'input window, operand 0, single buffered']
    #allocation3 [shape = 's32[1]{0}', space=sflag, size = 0x4, scoped, tag = 'scoped memory for tpu_custom_call.1']
    #allocation4 [shape = 's32[1]{0}', space=sflag, size = 0x4, scoped, tag = 'scoped memory for tpu_custom_call.1']
    #allocation5 [shape = 'u8[8192]{0}', space=vmem, size = 0x2000, scoped, tag = 'input window, operand 1, single buffered']
    #allocation6 [shape = 's32[1]{0}', space=sflag, size = 0x4, scoped, tag = 'scoped memory for tpu_custom_call.1']
    #allocation7 [shape = 'u8[8192]{0}', space=vmem, size = 0x2000, scoped, tag = 'output window, operand 0, single buffered']
    %7 = vsyncpa [#allocation3], 0
    %8 = vsyncpa [#allocation6], 0
    %9 = vsyncpa [#allocation4], 0
    // Predicated region
    $region2: #{tpu_custom_call.1} parent=1 // pred_check
      _
    $region3: #{tpu_custom_call.1} parent=1 // pred_check_branch
      %11 = sbr.rel (0) target = $region5
    $region4: #{tpu_custom_call.1} parent=1 // pred_region
      %s13 = ssub.s32 256, 256
      %14 = vsyncadd [#allocation3], %s13
      %s15 = sshll.u32 [#allocation2], 4
      %s16 = int_to_ptr.vmem [resolvable:$true] %s15
      %21 = dma.hbm_to_vmem [thread:$0]  %s0, 256, %s16, [#allocation3], 128, 128, 8
    $region5: #{tpu_custom_call.1} parent=1 // pred_fallthru
      _
    // Predicated region
    $region6: #{tpu_custom_call.1} parent=1 // pred_check
      _
    $region7: #{tpu_custom_call.1} parent=1 // pred_check_branch
      %23 = sbr.rel (0) target = $region9
    $region8: #{tpu_custom_call.1} parent=1 // pred_region
      %s25 = ssub.s32 256, 256
      %26 = vsyncadd [#allocation6], %s25
      %s27 = sshll.u32 [#allocation5], 4
      %s28 = int_to_ptr.vmem [resolvable:$true] %s27
      %33 = dma.hbm_to_vmem [thread:$0]  %s1, 256, %s28, [#allocation6], 128, 128, 8
    $region9: #{tpu_custom_call.1} parent=1 // pred_fallthru
      _
    // Predicated region
    $region10: #{tpu_custom_call.1} parent=1 // pred_check
      _
    $region11: #{tpu_custom_call.1} parent=1 // pred_check_branch
      %35 = sbr.rel (0) target = $region13
    $region12: #{tpu_custom_call.1} parent=1 // pred_region
      %36 = dma.done [#allocation3], 256
    $region13: #{tpu_custom_call.1} parent=1 // pred_fallthru
      _
    // Predicated region
    $region14: #{tpu_custom_call.1} parent=1 // pred_check
      _
    $region15: #{tpu_custom_call.1} parent=1 // pred_check_branch
      %38 = sbr.rel (0) target = $region17
    $region16: #{tpu_custom_call.1} parent=1 // pred_region
      %39 = dma.done [#allocation6], 256
    $region17: #{tpu_custom_call.1} parent=1 // pred_fallthru
      _
    %v40 = vld [vmem:[#allocation5] sm:$0xff]
    %v41 = vld [vmem:[#allocation5 + $0x8] sm:$0xff]
    %v42 = vxor.u32 %v40, 2147483648
    %v43 = vxor.u32 %v41, 2147483648
    %v44 = vmul.f32 %v42, 1.442695
    %v45 = vpow.pop %v44
    %v46 = vmul.f32 %v43, 1.442695
    %v47 = vpow.pop %v46
    %v48 = vadd.f32 %v45, 1.0
    %v49 = vadd.f32 %v47, 1.0
    %v50 = vrcp.pop %v48
    %v51 = vmul.f32 1.0, %v50
    %v52 = vrcp.pop %v49
    %v53 = vmul.f32 1.0, %v52
    %v54 = vmul.f32 %v51, 1.2
    %v55 = vmul.f32 %v53, 1.2
    %v56 = vadd.f32 %v54, -0.1
    %v57 = vadd.f32 %v55, -0.1
    %v58 = vmax.f32 %v56, 0.0
    %v59 = vmax.f32 %v57, 0.0
    %v60 = vmin.f32 %v58, 1.0
    %v61 = vmin.f32 %v59, 1.0
    %v62 = vld [vmem:[#allocation2] sm:$0xff]
    %v63 = vld [vmem:[#allocation2 + $0x8] sm:$0xff]
    %v64 = vmul.f32 %v62, %v60
    %v65 = vmul.f32 %v63, %v61
    %vm66 = vcmask 261120
    %67 = vst.msk [vmem:[#allocation7] sm:$0xff] %vm66, %v64
    %68 = vst.msk [vmem:[#allocation7 + $0x8] sm:$0xff] %vm66, %v65
    // Predicated region
    $region18: #{tpu_custom_call.1} parent=1 // pred_check
      _
    $region19: #{tpu_custom_call.1} parent=1 // pred_check_branch
      %70 = sbr.rel (0) target = $region21
    $region20: #{tpu_custom_call.1} parent=1 // pred_region
      %s72 = ssub.s32 256, 256
      %73 = vsyncadd [#allocation4], %s72
      %s74 = sshll.u32 [#allocation7], 4
      %s75 = int_to_ptr.vmem [resolvable:$true] %s74
      %80 = dma.vmem_to_hbm [thread:$0]  %s75, 256, %s2, [#allocation4], 128, 128, 8
    $region21: #{tpu_custom_call.1} parent=1 // pred_fallthru
      _
    // Predicated region
    $region22: #{tpu_custom_call.1} parent=1 // pred_check
      _
    $region23: #{tpu_custom_call.1} parent=1 // pred_check_branch
      %82 = sbr.rel (0) target = $region25
    $region24: #{tpu_custom_call.1} parent=1 // pred_region
      %83 = dma.done [#allocation4], 256
    $region25: #{tpu_custom_call.1} parent=1 // pred_fallthru
      _
    %84 = vsyncpa [#allocation3], 1
    %85 = vsyncpa [#allocation6], 1
    %86 = vsyncpa [#allocation4], 1

</llo_original>
